<compile_context>
chip_gen: v7x
topology: tpu7x:2x2x1
jax: 0.10.0
libtpu: 0.0.40
codegen_flags: <defaults>
</compile_context>

<pallas_src>
import functools
import math

import jax
import jax.numpy as jnp
from jax import lax
from jax.experimental import pallas as pl
from jax.experimental.pallas import tpu as pltpu


def _ceil_to(x, m):
    return ((x + m - 1) // m) * m


def _detect_vmem_limit():
    """Generation-aware scoped-VMEM budget (v7x: 64 MiB phys, v5e/v6e: 128 MiB)."""
    default = 48 * 1024 * 1024
    try:
        info = pltpu.get_tpu_info()
        cap = getattr(info, "vmem_capacity_bytes", None)
        if cap:
            return int(min(max(cap * 3 // 4, default), 112 * 1024 * 1024))
    except Exception:
        pass
    return default


_VMEM_LIMIT = _detect_vmem_limit()
_MAX_TM = 512 if _VMEM_LIMIT > 64 * 1024 * 1024 else 256


def _cparams(sem):
    return pltpu.CompilerParams(dimension_semantics=sem,
                                vmem_limit_bytes=_VMEM_LIMIT)


def _pick_tile_and_pad(dim, max_tile=512):
    """Return (tile, padded_dim).  Keeps tiles >=256 for big dims (MXU-friendly)
    and chooses the candidate that minimizes zero padding."""
    dp = _ceil_to(dim, 128)
    if dp <= max_tile:
        return dp, dp
    best_t, best_p = None, None
    for t in (512, 384, 256):
        if t > max_tile:
            continue
        p = _ceil_to(dim, t)
        if best_p is None or p < best_p:
            best_t, best_p = t, p
    if best_t is None:
        best_t = max_tile
        best_p = _ceil_to(dim, best_t)
    return best_t, best_p


def _pick_hw_tile(hw, cap=2048):
    if hw <= cap:
        return hw
    t = cap - (cap % 8)
    while t >= 8:
        if hw % t == 0:
            return t
        t -= 8
    return hw


# ----------------------------- Pallas kernels ------------------------------

def _matmul_kernel(a_ref, b_ref, bias_ref, o_ref, acc_ref, *, act):
    @pl.when(pl.program_id(2) == 0)
    def _():
        acc_ref[...] = jnp.zeros_like(acc_ref)

    acc_ref[...] += jnp.dot(a_ref[...], b_ref[...],
                            preferred_element_type=jnp.float32)

    @pl.when(pl.program_id(2) == pl.num_programs(2) - 1)
    def _():
        y = acc_ref[...] + bias_ref[...]
        if act == "silu":
            y = y * jax.nn.sigmoid(y)
        o_ref[...] = y.astype(o_ref.dtype)


def pallas_matmul(a, b, bias=None, act=None, out_dtype=jnp.bfloat16):
    """a: (M, K), b: (K, N) (bf16 weights), bias: (N,) or None.

    bf16 MXU operand tiles, f32 VMEM accumulator, tiled K-reduction, bf16 output.
    """
    M, K = a.shape
    K2, N = b.shape
    assert K == K2

    Mp0 = _ceil_to(M, 8)
    if Mp0 <= _MAX_TM:
        tm, Mp = Mp0, Mp0
    else:
        tm = _MAX_TM
        Mp = _ceil_to(M, tm)
    tk, Kp = _pick_tile_and_pad(K, 512)
    tn, Np = _pick_tile_and_pad(N, 512)

    a_p = a.astype(jnp.bfloat16)
    if (Mp, Kp) != (M, K):
        a_p = jnp.pad(a_p, ((0, Mp - M), (0, Kp - K)))
    b_p = b.astype(jnp.bfloat16)
    if (Kp, Np) != (K, N):
        b_p = jnp.pad(b_p, ((0, Kp - K), (0, Np - N)))
    if bias is None:
        bias_p = jnp.zeros((1, Np), jnp.float32)
    else:
        bias_p = bias.astype(jnp.float32).reshape(1, N)
        if Np != N:
            bias_p = jnp.pad(bias_p, ((0, 0), (0, Np - N)))

    out = pl.pallas_call(
        functools.partial(_matmul_kernel, act=act),
        out_shape=jax.ShapeDtypeStruct((Mp, Np), out_dtype),
        grid=(Mp // tm, Np // tn, Kp // tk),
        in_specs=[pl.BlockSpec((tm, tk), lambda i, j, k: (i, k)),
                  pl.BlockSpec((tk, tn), lambda i, j, k: (k, j)),
                  pl.BlockSpec((1, tn), lambda i, j, k: (0, j))],
        out_specs=pl.BlockSpec((tm, tn), lambda i, j, k: (i, j)),
        scratch_shapes=[pltpu.VMEM((tm, tn), jnp.float32)],
        compiler_params=_cparams(("parallel", "parallel", "arbitrary")),
    )(a_p, b_p, bias_p)
    if (Mp, Np) != (M, N):
        out = out[:M, :N]
    return out


def _gn_stats_kernel(x_ref, cg_ref, gc_ref, g_ref, b_ref, o_ref,
                     sum_ref, ssq_ref, *, count, eps):
    t = pl.program_id(1)

    @pl.when(t == 0)
    def _():
        sum_ref[...] = jnp.zeros_like(sum_ref)
        ssq_ref[...] = jnp.zeros_like(ssq_ref)

    x = x_ref[0].astype(jnp.float32)                 # (thw, C)
    sum_ref[...] += jnp.sum(x, axis=0, keepdims=True)
    ssq_ref[...] += jnp.sum(x * x, axis=0, keepdims=True)

    @pl.when(t == pl.num_programs(1) - 1)
    def _():
        # Per-group aggregation via tiny one-hot (C,G)/(G,C) matmuls.
        gsum = jnp.dot(sum_ref[...], cg_ref[...], preferred_element_type=jnp.float32)
        gssq = jnp.dot(ssq_ref[...], cg_ref[...], preferred_element_type=jnp.float32)
        mean_g = gsum / count
        # TODO(synk): Welford / two-pass variance to avoid E[x^2]-mean^2 cancellation.
        var_g = jnp.maximum(gssq / count - mean_g * mean_g, 0.0)
        inv_g = lax.rsqrt(var_g + eps)
        mean_c = jnp.dot(mean_g, gc_ref[...], preferred_element_type=jnp.float32)
        inv_c = jnp.dot(inv_g, gc_ref[...], preferred_element_type=jnp.float32)
        scale = inv_c * g_ref[...]
        shift = b_ref[...] - mean_c * scale
        o_ref[0] = jnp.concatenate([scale, shift], axis=0)   # (2, C)


def _gn_apply_kernel(x_ref, st_ref, o_ref, *, use_silu):
    x = x_ref[0].astype(jnp.float32)
    scale = st_ref[0, 0:1, :]
    shift = st_ref[0, 1:2, :]
    y = x * scale + shift
    if use_silu:
        y = y * jax.nn.sigmoid(y)
    o_ref[0] = y.astype(o_ref.dtype)


def _layer_norm_kernel(x_ref, g_ref, b_ref, o_ref, *, count, eps):
    x = x_ref[...].astype(jnp.float32)
    mean = jnp.sum(x, axis=-1, keepdims=True) / count
    xc = x - mean
    var = jnp.sum(xc * xc, axis=-1, keepdims=True) / count
    inv = lax.rsqrt(var + eps)
    o_ref[...] = (xc * inv * g_ref[...] + b_ref[...]).astype(o_ref.dtype)


def _attention_kernel(q_ref, k_ref, v_ref, o_ref, *, n_heads, scale):
    # One sample per grid step, all heads; lane-dense (Sq, C) bf16 output.
    q = q_ref[0]                                     # (Sq, C) bf16
    k = k_ref[0]                                     # (Sk, C) bf16
    v = v_ref[0]
    d = q.shape[-1] // n_heads
    outs = []
    for h in range(n_heads):
        lo = h * d
        qh = q[:, lo:lo + d]
        kh = k[:, lo:lo + d]
        vh = v[:, lo:lo + d]
        s = lax.dot_general(qh, kh, (((1,), (1,)), ((), ())),
                            preferred_element_type=jnp.float32) * scale
        m = jnp.max(s, axis=-1, keepdims=True)
        p = jnp.exp(s - m)
        r = pl.reciprocal(jnp.sum(p, axis=-1, keepdims=True), approx=True)
        p = p * r
        outs.append(jnp.dot(p.astype(vh.dtype), vh,
                            preferred_element_type=jnp.float32))
    o_ref[0] = jnp.concatenate(outs, axis=-1).astype(o_ref.dtype)


# ----------------------------- layer wrappers -------------------------------

_GN_MATS = {}


def _group_mats(C, G):
    key = (C, G)
    if key not in _GN_MATS:
        idx = jnp.arange(C) // (C // G)
        cg = (idx[:, None] == jnp.arange(G)[None, :]).astype(jnp.float32)
        _GN_MATS[key] = (cg, cg.T)
    return _GN_MATS[key]


def group_norm(x, p, num_groups=32, eps=1e-5, silu=False):
    # x: (N, H, W, C) NHWC (bf16 activation stream).
    N, H, W, C = x.shape
    G = num_groups
    Cg = C // G
    HW = H * W
    thw = _pick_hw_tile(HW)
    T = HW // thw
    cg, gc = _group_mats(C, G)
    gamma = p['w'].reshape(1, C)
    beta = p['b'].reshape(1, C)
    x3 = x.reshape(N, HW, C).astype(jnp.bfloat16)

    stats = pl.pallas_call(
        functools.partial(_gn_stats_kernel, count=float(HW * Cg), eps=eps),
        out_shape=jax.ShapeDtypeStruct((N, 2, C), jnp.float32),
        grid=(N, T),
        in_specs=[pl.BlockSpec((1, thw, C), lambda n, t: (n, t, 0)),
                  pl.BlockSpec((C, G), lambda n, t: (0, 0)),
                  pl.BlockSpec((G, C), lambda n, t: (0, 0)),
                  pl.BlockSpec((1, C), lambda n, t: (0, 0)),
                  pl.BlockSpec((1, C), lambda n, t: (0, 0))],
        out_specs=pl.BlockSpec((1, 2, C), lambda n, t: (n, 0, 0)),
        scratch_shapes=[pltpu.VMEM((1, C), jnp.float32),
                        pltpu.VMEM((1, C), jnp.float32)],
        compiler_params=_cparams(("parallel", "arbitrary")),
    )(x3, cg, gc, gamma, beta)

    out = pl.pallas_call(
        functools.partial(_gn_apply_kernel, use_silu=silu),
        out_shape=jax.ShapeDtypeStruct((N, HW, C), jnp.bfloat16),
        grid=(N, T),
        in_specs=[pl.BlockSpec((1, thw, C), lambda n, t: (n, t, 0)),
                  pl.BlockSpec((1, 2, C), lambda n, t: (n, 0, 0))],
        out_specs=pl.BlockSpec((1, thw, C), lambda n, t: (n, t, 0)),
        compiler_params=_cparams(("parallel", "parallel")),
    )(x3, stats)
    return out.reshape(N, H, W, C)


def layer_norm(x, p, eps=1e-5):
    shp = x.shape
    C = shp[-1]
    x2 = x.reshape(-1, C).astype(jnp.bfloat16)
    R = x2.shape[0]
    Rp0 = _ceil_to(R, 8)
    tr = Rp0 if Rp0 <= 512 else 512
    Rp = _ceil_to(R, tr)
    if Rp != R:
        x2 = jnp.pad(x2, ((0, Rp - R), (0, 0)))
    gamma = p['w'].reshape(1, C)
    beta = p['b'].reshape(1, C)
    out = pl.pallas_call(
        functools.partial(_layer_norm_kernel, count=float(C), eps=eps),
        out_shape=jax.ShapeDtypeStruct((Rp, C), jnp.bfloat16),
        grid=(Rp // tr,),
        in_specs=[pl.BlockSpec((tr, C), lambda i: (i, 0)),
                  pl.BlockSpec((1, C), lambda i: (0, 0)),
                  pl.BlockSpec((1, C), lambda i: (0, 0))],
        out_specs=pl.BlockSpec((tr, C), lambda i: (i, 0)),
        compiler_params=_cparams(("parallel",)),
    )(x2, gamma, beta)
    if Rp != R:
        out = out[:R]
    return out.reshape(shp)


def multi_head_attention(q, k, v, n_heads):
    # q: (N, Sq, C), k/v: (N, Sk, C).  No HBM transposes; one sample per step.
    N, Sq, C = q.shape
    Sk = k.shape[1]
    D = C // n_heads
    q = q.astype(jnp.bfloat16)
    k = k.astype(jnp.bfloat16)
    v = v.astype(jnp.bfloat16)
    kern = functools.partial(_attention_kernel, n_heads=n_heads,
                             scale=1.0 / math.sqrt(D))
    return pl.pallas_call(
        kern,
        out_shape=jax.ShapeDtypeStruct((N, Sq, C), jnp.bfloat16),
        grid=(N,),
        in_specs=[pl.BlockSpec((1, Sq, C), lambda n: (n, 0, 0)),
                  pl.BlockSpec((1, Sk, C), lambda n: (n, 0, 0)),
                  pl.BlockSpec((1, Sk, C), lambda n: (n, 0, 0))],
        out_specs=pl.BlockSpec((1, Sq, C), lambda n: (n, 0, 0)),
        compiler_params=_cparams(("parallel",)),
    )(q, k, v)


def conv2d(x, p, stride=1, padding=1):
    # x: (N, H, W, C) NHWC; weights pre-reshaped to (k*k*Cin, Cout) bf16 at init.
    w, b, k = p['w'], p['b'], p['k']
    N, H, W, Cin = x.shape
    Ho = (H + 2 * padding - k) // stride + 1
    Wo = (W + 2 * padding - k) // stride + 1
    Cout = w.shape[1]
    xb = x.astype(jnp.bfloat16)
    if k == 1 and stride == 1 and padding == 0:
        a = xb.reshape(N * H * W, Cin)
    else:
        xp = xb if padding == 0 else jnp.pad(
            xb, ((0, 0), (padding, padding), (padding, padding), (0, 0)))
        cols = []
        for i in range(k):
            for j in range(k):
                cols.append(xp[:, i:i + (Ho - 1) * stride + 1:stride,
                               j:j + (Wo - 1) * stride + 1:stride, :])
        a = jnp.concatenate(cols, axis=-1).reshape(N * Ho * Wo, k * k * Cin)
    y = pallas_matmul(a, w, b)
    return y.reshape(N, Ho, Wo, Cout)


def linear(x, p, act=None):
    shp = x.shape
    y = pallas_matmul(x.reshape(-1, shp[-1]), p['w'], p['b'], act=act)
    return y.reshape(shp[:-1] + (p['w'].shape[1],))


def silu(x):
    return x * jax.nn.sigmoid(x)


def upsample2x(x):
    # Nearest-neighbour, single materialization (no double jnp.repeat).
    # TODO(synk): fold the 2x upsample into the following conv's input index_map.
    N, H, W, C = x.shape
    x = jnp.broadcast_to(x[:, :, None, :, None, :], (N, H, 2, W, 2, C))
    return x.reshape(N, 2 * H, 2 * W, C)


# ----------------------------- parameter setup ------------------------------

class ParamInit:
    def __init__(self, seed=0):
        self._key = jax.random.PRNGKey(seed)
        self._n = 0

    def normal(self, shape, scale):
        self._n += 1
        k = jax.random.fold_in(self._key, self._n)
        return scale * jax.random.normal(k, shape, jnp.float32)


def make_conv(init, cin, cout, k):
    s = 1.0 / math.sqrt(cin * k * k)
    w4 = init.normal((cout, cin, k, k), s)
    wmat = jnp.transpose(w4, (2, 3, 1, 0)).reshape(k * k * cin, cout)
    return {'w': wmat.astype(jnp.bfloat16), 'b': init.normal((cout,), s), 'k': k}


def make_linear(init, din, dout, bias=True):
    s = 1.0 / math.sqrt(din)
    p = {'w': init.normal((din, dout), s).astype(jnp.bfloat16)}
    p['b'] = init.normal((dout,), s) if bias else None
    return p


def make_norm(c):
    return {'w': jnp.ones((c,), jnp.float32), 'b': jnp.zeros((c,), jnp.float32)}


def make_resnet(init, cin, cout, n_time):
    return {
        'gn1': make_norm(cin),
        'conv1': make_conv(init, cin, cout, 3),
        'time': make_linear(init, n_time, cout),
        'gn2': make_norm(cout),
        'conv2': make_conv(init, cout, cout, 3),
        'skip': None if cin == cout else make_conv(init, cin, cout, 1),
    }


def make_attn_block(init, n_head, d_head, d_context):
    c = n_head * d_head
    return {
        'n_head': n_head,
        'gn': make_norm(c),
        'conv_in': make_conv(init, c, c, 1),
        'ln1': make_norm(c),
        'self_in': make_linear(init, c, 3 * c, bias=False),
        'self_out': make_linear(init, c, c),
        'ln2': make_norm(c),
        'q': make_linear(init, c, c, bias=False),
        'k': make_linear(init, d_context, c, bias=False),
        'v': make_linear(init, d_context, c, bias=False),
        'x_out': make_linear(init, c, c),
        'ln3': make_norm(c),
        'geglu1': make_linear(init, c, 8 * c),
        'geglu2': make_linear(init, 4 * c, c),
        'conv_out': make_conv(init, c, c, 1),
    }


def make_encoder(init, init_channels, nc, n_time, d_ctx):
    return {
        'conv_in': make_conv(init, init_channels, nc, 3),
        'initial_res1': make_resnet(init, nc, nc, n_time),
        'initial_res2': make_resnet(init, nc, nc, n_time),
        'attn_1': make_attn_block(init, 8, nc // 8, d_ctx),
        'attn_2': make_attn_block(init, 8, nc // 8, d_ctx),
        'down_conv1': make_conv(init, nc, nc, 3),
        'down1_res1': make_resnet(init, nc, 2 * nc, n_time),
        'down1_res2': make_resnet(init, 2 * nc, 2 * nc, n_time),
        'down1_attn1': make_attn_block(init, 8, 2 * nc // 8, d_ctx),
        'down1_attn2': make_attn_block(init, 8, 2 * nc // 8, d_ctx),
        'down_conv2': make_conv(init, 2 * nc, 2 * nc, 3),
        'down2_res1': make_resnet(init, 2 * nc, 4 * nc, n_time),
        'down2_res2': make_resnet(init, 4 * nc, 4 * nc, n_time),
        'down2_attn1': make_attn_block(init, 8, 4 * nc // 8, d_ctx),
        'down2_attn2': make_attn_block(init, 8, 4 * nc // 8, d_ctx),
        'down_conv3': make_conv(init, 4 * nc, 4 * nc, 3),
        'down3_res1': make_resnet(init, 4 * nc, 4 * nc, n_time),
        'down3_res2': make_resnet(init, 4 * nc, 4 * nc, n_time),
    }


def make_bottleneck(init, nc, n_time, d_ctx):
    return {
        'res1': make_resnet(init, nc, nc, n_time),
        'attn': make_attn_block(init, 8, nc // 8, d_ctx),
        'res2': make_resnet(init, nc, nc, n_time),
    }


def make_decoder(init, init_channels, nc, n_time, d_ctx):
    return {
        'initial_res1': make_resnet(init, 8 * nc, 4 * nc, n_time),
        'initial_res2': make_resnet(init, 8 * nc, 4 * nc, n_time),
        'initial_res3': make_resnet(init, 8 * nc, 4 * nc, n_time),
        'up_conv1': make_conv(init, 4 * nc, 4 * nc, 3),
        'up1_res1': make_resnet(init, 8 * nc, 4 * nc, n_time),
        'up1_res2': make_resnet(init, 8 * nc, 4 * nc, n_time),
        'up1_res3': make_resnet(init, 6 * nc, 4 * nc, n_time),
        'up1_attn1': make_attn_block(init, 8, 4 * nc // 8, d_ctx),
        'up1_attn2': make_attn_block(init, 8, 4 * nc // 8, d_ctx),
        'up1_attn3': make_attn_block(init, 8, 4 * nc // 8, d_ctx),
        'up_conv2': make_conv(init, 4 * nc, 4 * nc, 3),
        'up2_res1': make_resnet(init, 6 * nc, 2 * nc, n_time),
        'up2_res2': make_resnet(init, 4 * nc, 2 * nc, n_time),
        'up2_res3': make_resnet(init, 3 * nc, 2 * nc, n_time),
        'up2_attn1': make_attn_block(init, 8, 2 * nc // 8, d_ctx),
        'up2_attn2': make_attn_block(init, 8, 2 * nc // 8, d_ctx),
        'up2_attn3': make_attn_block(init, 8, 2 * nc // 8, d_ctx),
        'up_conv3': make_conv(init, 2 * nc, 2 * nc, 3),
        'up3_res1': make_resnet(init, 3 * nc, nc, n_time),
        'up3_res2': make_resnet(init, 2 * nc, nc, n_time),
        'up3_res3': make_resnet(init, 2 * nc, nc, n_time),
        'up3_attn1': make_attn_block(init, 8, nc // 8, d_ctx),
        'up3_attn2': make_attn_block(init, 8, nc // 8, d_ctx),
        'up3_attn3': make_attn_block(init, 8, nc // 8, d_ctx),
        'normalize': make_norm(nc),
        'conv_out': make_conv(init, nc, init_channels, 3),
    }


def make_diffusion(init, init_channels=4, out_channels=320, d_context=768):
    n_time = 4 * out_channels
    return {
        'time_embed': {'lin1': make_linear(init, out_channels, n_time),
                       'lin2': make_linear(init, n_time, n_time)},
        'encoder': make_encoder(init, init_channels, out_channels, n_time, d_context),
        'bottleneck': make_bottleneck(init, 4 * out_channels, n_time, d_context),
        'decoder': make_decoder(init, init_channels, out_channels, n_time, d_context),
    }


# ----------------------------- forward passes -------------------------------

def resnet_block(p, x, time):
    residue = x
    h = group_norm(x, p['gn1'], silu=True)
    h = conv2d(h, p['conv1'], stride=1, padding=1)
    t = linear(silu(time), p['time'])
    h = h + t[:, None, None, :]
    h = group_norm(h, p['gn2'], silu=True)
    h = conv2d(h, p['conv2'], stride=1, padding=1)
    if p['skip'] is not None:
        residue = conv2d(residue, p['skip'], stride=1, padding=0)
    return h + residue


def attn_block(p, x, context):
    n_head = p['n_head']
    residue_long = x
    h = group_norm(x, p['gn'], eps=1e-6, silu=False)
    h = conv2d(h, p['conv_in'], stride=1, padding=0)
    N, H, W, C = h.shape
    h = h.reshape(N, H * W, C)

    r = h                                                     # self-attention
    h = layer_norm(h, p['ln1'])
    qkv = linear(h, p['self_in'])
    q, k, v = jnp.split(qkv, 3, axis=-1)
    h = multi_head_attention(q, k, v, n_head)
    h = linear(h, p['self_out'])
    h = h + r

    r = h                                                     # cross-attention
    h = layer_norm(h, p['ln2'])
    q = linear(h, p['q'])
    k = linear(context, p['k'])
    v = linear(context, p['v'])
    h = multi_head_attention(q, k, v, n_head)
    h = linear(h, p['x_out'])
    h = h + r

    r = h                                                     # GeGLU FFN
    h = layer_norm(h, p['ln3'])
    hg = linear(h, p['geglu1'])
    a, gate = jnp.split(hg, 2, axis=-1)
    h = a * jax.nn.gelu(gate, approximate=False)
    h = linear(h, p['geglu2'])
    h = h + r

    h = h.reshape(N, H, W, C)
    h = conv2d(h, p['conv_out'], stride=1, padding=0)
    return h + residue_long


def encoder_forward(p, x, prompt, timesteps):
    skips = []
    x = conv2d(x, p['conv_in'], stride=1, padding=1); skips.append(x)
    x = resnet_block(p['initial_res1'], x, timesteps)
    x = attn_block(p['attn_1'], x, prompt); skips.append(x)
    x = resnet_block(p['initial_res2'], x, timesteps)
    x = attn_block(p['attn_2'], x, prompt); skips.append(x)
    x = conv2d(x, p['down_conv1'], stride=2, padding=1); skips.append(x)
    x = resnet_block(p['down1_res1'], x, timesteps)
    x = attn_block(p['down1_attn1'], x, prompt); skips.append(x)
    x = resnet_block(p['down1_res2'], x, timesteps)
    x = attn_block(p['down1_attn2'], x, prompt); skips.append(x)
    x = conv2d(x, p['down_conv2'], stride=2, padding=1); skips.append(x)
    x = resnet_block(p['down2_res1'], x, timesteps)
    x = attn_block(p['down2_attn1'], x, prompt); skips.append(x)
    x = resnet_block(p['down2_res2'], x, timesteps)
    x = attn_block(p['down2_attn2'], x, prompt); skips.append(x)
    x = conv2d(x, p['down_conv3'], stride=2, padding=1); skips.append(x)
    x = resnet_block(p['down3_res1'], x, timesteps); skips.append(x)
    x = resnet_block(p['down3_res2'], x, timesteps); skips.append(x)
    return x, skips


def bottleneck_forward(p, x, prompt, timesteps):
    x = resnet_block(p['res1'], x, timesteps)
    x = attn_block(p['attn'], x, prompt)
    x = resnet_block(p['res2'], x, timesteps)
    return x


def decoder_forward(p, x, prompt, timesteps, skips):
    x = jnp.concatenate((x, skips.pop()), axis=-1)
    x = resnet_block(p['initial_res1'], x, timesteps)
    x = jnp.concatenate((x, skips.pop()), axis=-1)
    x = resnet_block(p['initial_res2'], x, timesteps)
    x = jnp.concatenate((x, skips.pop()), axis=-1)
    x = resnet_block(p['initial_res3'], x, timesteps)
    x = upsample2x(x)
    x = conv2d(x, p['up_conv1'], stride=1, padding=1)
    x = jnp.concatenate((x, skips.pop()), axis=-1)
    x = resnet_block(p['up1_res1'], x, timesteps)
    x = attn_block(p['up1_attn1'], x, prompt)
    x = jnp.concatenate((x, skips.pop()), axis=-1)
    x = resnet_block(p['up1_res2'], x, timesteps)
    x = attn_block(p['up1_attn2'], x, prompt)
    x = jnp.concatenate((x, skips.pop()), axis=-1)
    x = resnet_block(p['up1_res3'], x, timesteps)
    x = attn_block(p['up1_attn3'], x, prompt)
    x = upsample2x(x)
    x = conv2d(x, p['up_conv2'], stride=1, padding=1)
    x = jnp.concatenate((x, skips.pop()), axis=-1)
    x = resnet_block(p['up2_res1'], x, timesteps)
    x = attn_block(p['up2_attn1'], x, prompt)
    x = jnp.concatenate((x, skips.pop()), axis=-1)
    x = resnet_block(p['up2_res2'], x, timesteps)
    x = attn_block(p['up2_attn2'], x, prompt)
    x = jnp.concatenate((x, skips.pop()), axis=-1)
    x = resnet_block(p['up2_res3'], x, timesteps)
    x = attn_block(p['up2_attn3'], x, prompt)
    x = upsample2x(x)
    x = conv2d(x, p['up_conv3'], stride=1, padding=1)
    x = jnp.concatenate((x, skips.pop()), axis=-1)
    x = resnet_block(p['up3_res1'], x, timesteps)
    x = attn_block(p['up3_attn1'], x, prompt)
    x = jnp.concatenate((x, skips.pop()), axis=-1)
    x = resnet_block(p['up3_res2'], x, timesteps)
    x = attn_block(p['up3_attn2'], x, prompt)
    x = jnp.concatenate((x, skips.pop()), axis=-1)
    x = resnet_block(p['up3_res3'], x, timesteps)
    x = attn_block(p['up3_attn3'], x, prompt)
    x = group_norm(x, p['normalize'], eps=1e-6, silu=True)   # GN + SiLU fused
    x = conv2d(x, p['conv_out'], stride=1, padding=1)
    return x


def timestep_block(p, t):
    h = linear(t, p['lin1'], act="silu")   # SiLU fused into matmul epilogue
    h = linear(h, p['lin2'])
    return h


def diffusion_forward(params, latent, conditioning, timestep):
    time_emb = timestep_block(params['time_embed'], timestep)
    x = jnp.transpose(latent, (0, 2, 3, 1)).astype(jnp.bfloat16)  # NCHW -> NHWC
    x, skips = encoder_forward(params['encoder'], x, conditioning, time_emb)
    x = bottleneck_forward(params['bottleneck'], x, conditioning, time_emb)
    x = decoder_forward(params['decoder'], x, conditioning, time_emb, skips)
    return jnp.transpose(x, (0, 3, 1, 2)).astype(jnp.float32)     # back to NCHW


# ----------------------------------- main -----------------------------------

if __name__ == "__main__":
    # Structurally identical to the reference (out_channels=320, d_context=768,
    # 32x32 latents) but run at a small scale for the demo.
    BASE = 32          # channel multiplier; must be a multiple of 32 (GroupNorm)
    D_CTX = 64         # prompt / conditioning embedding dim
    BATCH = 1
    H = W = 16         # latent spatial size (downsamples 16 -> 8 -> 4 -> 2)
    SEQ = 8            # prompt sequence length

    init = ParamInit(seed=0)
    params = make_diffusion(init, init_channels=4, out_channels=BASE,
                            d_context=D_CTX)

    key = jax.random.PRNGKey(0)
    k1, k2, k3 = jax.random.split(key, 3)
    latent = jax.random.normal(k1, (BATCH, 4, H, W), jnp.float32)
    conditioning = jax.random.normal(k2, (BATCH, SEQ, D_CTX), jnp.float32)
    timestep = jax.random.normal(k3, (1, BASE), jnp.float32)

    out = diffusion_forward(params, latent, conditioning, timestep)
    out = jax.block_until_ready(out)
    assert out.shape == (BATCH, 4, H, W), out.shape
    assert bool(jnp.all(jnp.isfinite(out)))
    print("KERNEL_OK")
</pallas_src>

<mosaic_0001>
module attributes {stable_mosaic.version = 11 : i64} {
  func.func @_matmul_kernel(%arg0: i32, %arg1: i32, %arg2: i32, %arg3: memref<8x128xbf16, #tpu.memory_space<vmem>>, %arg4: memref<128x128xbf16, #tpu.memory_space<vmem>>, %arg5: memref<1x128xf32, #tpu.memory_space<vmem>>, %arg6: memref<8x128xbf16, #tpu.memory_space<vmem>>, %arg7: memref<8x128xf32, #tpu.memory_space<vmem>>) attributes {dimension_semantics = [#tpu.dimension_semantics<parallel>, #tpu.dimension_semantics<parallel>, #tpu.dimension_semantics<arbitrary>], iteration_bounds = array<i64: 1, 1, 1>, scalar_prefetch = 0 : i64, scratch_operands = 1 : i64, tpu.core_type = #tpu.core_type<tc>, window_params = [{transform_indices = @transform_0, window_bounds = array<i64: 8, 128>}, {transform_indices = @transform_1, window_bounds = array<i64: 128, 128>}, {transform_indices = @transform_2, window_bounds = array<i64: 1, 128>}, {transform_indices = @transform_3, window_bounds = array<i64: 8, 128>}]} {
    %c0_i32 = arith.constant 0 : i32
    %0 = arith.cmpi eq, %arg2, %c0_i32 : i32
    %1 = arith.extui %0 : i1 to i32
    %c0_i32_0 = arith.constant 0 : i32
    %2 = arith.cmpi ne, %1, %c0_i32_0 : i32
    scf.if %2 {
      %cst_10 = arith.constant 0.000000e+00 : f32
      %12 = vector.broadcast %cst_10 : f32 to vector<8x128xf32>
      %c0_11 = arith.constant 0 : index
      %c0_12 = arith.constant 0 : index
      %13 = vector.load %arg7[%c0_11, %c0_12] : memref<8x128xf32, #tpu.memory_space<vmem>>, vector<8x128xf32>
      tpu.vector_store %arg7[%c0_11, %c0_12], %12 {strides = array<i32>} : memref<8x128xf32, #tpu.memory_space<vmem>>, vector<8x128xf32>,
    } else {
    }
    %c0 = arith.constant 0 : index
    %c0_1 = arith.constant 0 : index
    %3 = vector.load %arg7[%c0, %c0_1] : memref<8x128xf32, #tpu.memory_space<vmem>>, vector<8x128xf32>
    %c0_2 = arith.constant 0 : index
    %c0_3 = arith.constant 0 : index
    %4 = vector.load %arg3[%c0_2, %c0_3] : memref<8x128xbf16, #tpu.memory_space<vmem>>, vector<8x128xbf16>
    %c0_4 = arith.constant 0 : index
    %c0_5 = arith.constant 0 : index
    %5 = vector.load %arg4[%c0_4, %c0_5] : memref<128x128xbf16, #tpu.memory_space<vmem>>, vector<128x128xbf16>
    %cst = arith.constant dense<0.000000e+00> : vector<8x128xf32>
    %6 = tpu.matmul %4, %5, %cst {dimension_numbers = #tpu.dot_dimension_numbers<[1], [0], [0], [1], [0, 0, 1, 1], [], []>} : vector<8x128xbf16>, vector<128x128xbf16>, vector<8x128xf32> -> vector<8x128xf32>
    %7 = arith.addf %3, %6 : vector<8x128xf32>
    %c0_6 = arith.constant 0 : index
    %c0_7 = arith.constant 0 : index
    %8 = vector.load %arg7[%c0_6, %c0_7] : memref<8x128xf32, #tpu.memory_space<vmem>>, vector<8x128xf32>
    tpu.vector_store %arg7[%c0_6, %c0_7], %7 {strides = array<i32>} : memref<8x128xf32, #tpu.memory_space<vmem>>, vector<8x128xf32>,
    %c0_i32_8 = arith.constant 0 : i32
    %9 = arith.cmpi eq, %arg2, %c0_i32_8 : i32
    %10 = arith.extui %9 : i1 to i32
    %c0_i32_9 = arith.constant 0 : i32
    %11 = arith.cmpi ne, %10, %c0_i32_9 : i32
    scf.if %11 {
      %c0_10 = arith.constant 0 : index
      %c0_11 = arith.constant 0 : index
      %12 = vector.load %arg7[%c0_10, %c0_11] : memref<8x128xf32, #tpu.memory_space<vmem>>, vector<8x128xf32>
      %c0_12 = arith.constant 0 : index
      %c0_13 = arith.constant 0 : index
      %13 = vector.load %arg5[%c0_12, %c0_13] : memref<1x128xf32, #tpu.memory_space<vmem>>, vector<1x128xf32>
      %14 = vector.broadcast %13 : vector<1x128xf32> to vector<8x128xf32>
      %15 = arith.addf %12, %14 : vector<8x128xf32>
      %16 = arith.negf %15 : vector<8x128xf32>
      %17 = math.exp %16 : vector<8x128xf32>
      %cst_14 = arith.constant 1.000000e+00 : f32
      %18 = vector.broadcast %cst_14 : f32 to vector<8x128xf32>
      %19 = arith.addf %18, %17 : vector<8x128xf32>
      %20 = arith.divf %18, %19 : vector<8x128xf32>
      %21 = arith.mulf %15, %20 : vector<8x128xf32>
      %22 = arith.truncf %21 : vector<8x128xf32> to vector<8x128xbf16>
      %c0_15 = arith.constant 0 : index
      %c0_16 = arith.constant 0 : index
      %23 = vector.load %arg6[%c0_15, %c0_16] : memref<8x128xbf16, #tpu.memory_space<vmem>>, vector<8x128xbf16>
      tpu.vector_store %arg6[%c0_15, %c0_16], %22 {strides = array<i32>} : memref<8x128xbf16, #tpu.memory_space<vmem>>, vector<8x128xbf16>,
    } else {
    }
    return
  }
  func.func @transform_0(%arg0: i32, %arg1: i32, %arg2: i32) -> (i32, i32) {
    %c0_i32 = arith.constant 0 : i32
    return %arg0, %arg2 : i32, i32
  }
  func.func @transform_1(%arg0: i32, %arg1: i32, %arg2: i32) -> (i32, i32) {
    %c0_i32 = arith.constant 0 : i32
    return %arg2, %arg1 : i32, i32
  }
  func.func @transform_2(%arg0: i32, %arg1: i32, %arg2: i32) -> (i32, i32) {
    %c0_i32 = arith.constant 0 : i32
    %c0_i32_0 = arith.constant 0 : i32
    return %c0_i32, %arg1 : i32, i32
  }
  func.func @transform_3(%arg0: i32, %arg1: i32, %arg2: i32) -> (i32, i32) {
    %c0_i32 = arith.constant 0 : i32
    return %arg0, %arg1 : i32, i32
  }
}

</mosaic_0001>

<llo_original>
// kernel: tpu_custom_call.1
$region0: #{tpu_custom_call.1}
  #allocation0 [shape = 'u32[]', space=smem, size = 0x4, offset = 0x4, fixed_abs, tag = 'smem constant byte address 0x4 - core index']
  #allocation1 [shape = 'u32[144,128]{1,0:T(1,128)}', space=vmem, size = 0x12000, scoped, tag = 'internal scratch']
  #allocation2 [shape = 'f32[8,128]{1,0:T(8,128)}', space=vmem, size = 0x1000, scoped, tag = 'scratch operand']
  %s0 = inlined_call_operand.hbm [shape: bf16[8,128], index: 0, kind: input, shape index: {}]
  %s1 = inlined_call_operand.hbm [shape: bf16[128,128], index: 1, kind: input, shape index: {}]
  %s2 = inlined_call_operand.vmem [shape: f32[1,128], index: 2, kind: input, shape index: {}]
  %s3 = inlined_call_operand.hbm [shape: bf16[8,128], index: 3, kind: output, shape index: {}]
  %s4 = sld [smem:[#allocation0]]
  $region38: #{tpu_custom_call.1} parent=0
    _
  %s6 = ssub.s32 1, %s4
  %s7 = scalar_select 0, %s6, %s4
  $region1: #{tpu_custom_call.1} parent=0
    #allocation3 [shape = 'u8[2048]{0}', space=vmem, size = 0x800, scoped, tag = 'input window, operand 0, single buffered']
    #allocation4 [shape = 's32[1]{0}', space=sflag, size = 0x4, scoped, tag = 'scoped memory for tpu_custom_call.1']
    #allocation5 [shape = 's32[1]{0}', space=sflag, size = 0x4, scoped, tag = 'scoped memory for tpu_custom_call.1']
    #allocation6 [shape = 'u8[32768]{0}', space=vmem, size = 0x8000, scoped, tag = 'input window, operand 1, single buffered']
    #allocation7 [shape = 's32[1]{0}', space=sflag, size = 0x4, scoped, tag = 'scoped memory for tpu_custom_call.1']
    #allocation8 [shape = 'u8[2048]{0}', space=vmem, size = 0x800, scoped, tag = 'output window, operand 0, single buffered']
    %8 = vsyncpa [#allocation4], 0
    %9 = vsyncpa [#allocation7], 0
    %10 = vsyncpa [#allocation5], 0
    // Predicated region
    $region2: #{tpu_custom_call.1} parent=1 // pred_check
      _
    $region3: #{tpu_custom_call.1} parent=1 // pred_check_branch
      %12 = sbr.rel (0) target = $region5
    $region4: #{tpu_custom_call.1} parent=1 // pred_region
      %s14 = ssub.s32 64, 64
      %15 = vsyncadd [#allocation4], %s14
      %s17 = sshll.u32 [#allocation3], 4
      %s18 = int_to_ptr.vmem [resolvable:$true] %s17
      %20 = dma.hbm_to_vmem [thread:$0]  %s0, 64, %s18, [#allocation4]
    $region5: #{tpu_custom_call.1} parent=1 // pred_fallthru
      _
    // Predicated region
    $region6: #{tpu_custom_call.1} parent=1 // pred_check
      _
    $region7: #{tpu_custom_call.1} parent=1 // pred_check_branch
      %22 = sbr.rel (0) target = $region9
    $region8: #{tpu_custom_call.1} parent=1 // pred_region
      %s24 = ssub.s32 1024, 1024
      %25 = vsyncadd [#allocation7], %s24
      %s26 = sshll.u32 [#allocation6], 4
      %s27 = int_to_ptr.vmem [resolvable:$true] %s26
      %32 = dma.hbm_to_vmem [thread:$0]  %s1, 1024, %s27, [#allocation7], 64, 64, 4
    $region9: #{tpu_custom_call.1} parent=1 // pred_fallthru
      _
    // Predicated region
    $region10: #{tpu_custom_call.1} parent=1 // pred_check
      _
    $region11: #{tpu_custom_call.1} parent=1 // pred_check_branch
      %34 = sbr.rel (0) target = $region13
    $region12: #{tpu_custom_call.1} parent=1 // pred_region
      _
    $region13: #{tpu_custom_call.1} parent=1 // pred_fallthru
      _
    // Predicated region
    $region14: #{tpu_custom_call.1} parent=1 // pred_check
      _
    $region15: #{tpu_custom_call.1} parent=1 // pred_check_branch
      %36 = sbr.rel (0) target = $region17
    $region16: #{tpu_custom_call.1} parent=1 // pred_region
      %37 = dma.done [#allocation4], 64
    $region17: #{tpu_custom_call.1} parent=1 // pred_fallthru
      _
    // Predicated region
    $region18: #{tpu_custom_call.1} parent=1 // pred_check
      _
    $region19: #{tpu_custom_call.1} parent=1 // pred_check_branch
      %39 = sbr.rel (0) target = $region21
    $region20: #{tpu_custom_call.1} parent=1 // pred_region
      %40 = dma.done [#allocation7], 1024
    $region21: #{tpu_custom_call.1} parent=1 // pred_fallthru
      _
    %p42 = scmp.eq.s32.totalorder 0, 0
    // Predicated region
    $region22: #{tpu_custom_call.1} parent=1 // pred_check
      %p43 = pneg %p42
    $region23: #{tpu_custom_call.1} parent=1 // pred_check_branch
      %45 = sbr.rel (%p43) target = $region25
    $region24: #{tpu_custom_call.1} parent=1 // pred_region
      %46 = vst [vmem:[#allocation2] sm:$0xff] 0.0
    $region25: #{tpu_custom_call.1} parent=1 // pred_fallthru
      _
    %v47 = vld [vmem:[#allocation2] sm:$0xff]
    %v48 = vld [vmem:[#allocation3] sm:$0xf]
    %v49 = vld [vmem:[#allocation6] sm:$0xf]
    %v50 = vld [vmem:[#allocation6 + $0x4] sm:$0xf]
    %v51 = vld [vmem:[#allocation6 + $0x8] sm:$0xf]
    %v52 = vld [vmem:[#allocation6 + $0xc] sm:$0xf]
    %v53 = vld [vmem:[#allocation6 + $0x10] sm:$0xf]
    %v54 = vld [vmem:[#allocation6 + $0x14] sm:$0xf]
    %v55 = vld [vmem:[#allocation6 + $0x18] sm:$0xf]
    %v56 = vld [vmem:[#allocation6 + $0x1c] sm:$0xf]
    %v57 = vld [vmem:[#allocation6 + $0x20] sm:$0xf]
    %v58 = vld [vmem:[#allocation6 + $0x24] sm:$0xf]
    %v59 = vld [vmem:[#allocation6 + $0x28] sm:$0xf]
    %v60 = vld [vmem:[#allocation6 + $0x2c] sm:$0xf]
    %v61 = vld [vmem:[#allocation6 + $0x30] sm:$0xf]
    %v62 = vld [vmem:[#allocation6 + $0x34] sm:$0xf]
    %v63 = vld [vmem:[#allocation6 + $0x38] sm:$0xf]
    %v64 = vld [vmem:[#allocation6 + $0x3c] sm:$0xf]
    %v81 = vunpack.c.l.b16 %v49
    %v82 = vunpack.c.l.b16 %v50
    %v83 = vunpack.c.l.b16 %v51
    %v84 = vunpack.c.l.b16 %v52
    %v85 = vunpack.c.l.b16 %v53
    %v86 = vunpack.c.l.b16 %v54
    %v87 = vunpack.c.l.b16 %v55
    %v88 = vunpack.c.l.b16 %v56
    %v89 = vunpack.c.l.b16 %v57
    %v90 = vunpack.c.l.b16 %v58
    %v91 = vunpack.c.l.b16 %v59
    %v92 = vunpack.c.l.b16 %v60
    %v93 = vunpack.c.l.b16 %v61
    %v94 = vunpack.c.l.b16 %v62
    %v95 = vunpack.c.l.b16 %v63
    %v96 = vunpack.c.l.b16 %v64
    %v97 = vpack.c.b16 %v82, %v81
    %v98 = vpack.c.b16 %v84, %v83
    %v99 = vpack.c.b16 %v86, %v85
    %v100 = vpack.c.b16 %v88, %v87
    %v101 = vpack.c.b16 %v90, %v89
    %v102 = vpack.c.b16 %v92, %v91
    %v103 = vpack.c.b16 %v94, %v93
    %v104 = vpack.c.b16 %v96, %v95
    %113 = vmatprep.subr.bf16.mxu0 0
    %114 = vmatpush1.bf16.msra.mxu0 %v97
    %115 = vmatprep.subr.bf16.mxu0 0
    %116 = vmatpush1.bf16.msra.mxu0 %v98
    %117 = vmatprep.subr.bf16.mxu0 0
    %118 = vmatpush1.bf16.msra.mxu0 %v99
    %119 = vmatprep.subr.bf16.mxu0 0
    %120 = vmatpush1.bf16.msra.mxu0 %v100
    %121 = vmatprep.subr.bf16.mxu0 0
    %122 = vmatpush1.bf16.msra.mxu0 %v101
    %123 = vmatprep.subr.bf16.mxu0 0
    %124 = vmatpush1.bf16.msra.mxu0 %v102
    %125 = vmatprep.subr.bf16.mxu0 0
    %126 = vmatpush1.bf16.msra.mxu0 %v103
    %127 = vmatprep.subr.bf16.mxu0 0
    %128 = vmatpush1.bf16.msra.mxu0 %v104
    %129 = vmatprep.subr.bf16.mxu0 0
    %130 = vmatpush1.bf16.msra.mxu0 0
    %131 = vmatprep.subr.bf16.mxu0 0
    %132 = vmatpush1.bf16.msra.mxu0 0
    %133 = vmatprep.subr.bf16.mxu0 0
    %134 = vmatpush1.bf16.msra.mxu0 0
    %135 = vmatprep.subr.bf16.mxu0 0
    %136 = vmatpush1.bf16.msra.mxu0 0
    %137 = vmatprep.subr.bf16.mxu0 0
    %138 = vmatpush1.bf16.msra.mxu0 0
    %139 = vmatprep.subr.bf16.mxu0 0
    %140 = vmatpush1.bf16.msra.mxu0 0
    %141 = vmatprep.subr.bf16.mxu0 0
    %142 = vmatpush1.bf16.msra.mxu0 0
    %143 = vmatprep.subr.bf16.mxu0 0
    %144 = vmatpush1.bf16.msra.mxu0 0
    %145 = vmatprep.mubr.bf16.mxu0 0
    %146 = vmatmul.mubr.bf16.gmra.mrb[0].mxu0 %v48
    %v147 = vpop.f32.mrb[0].mxu0
    %v148 = vadd.f32 0.0, %v147
    %v149 = vpop.f32.mrb[0].mxu0
    %v150 = vpop.f32.mrb[0].mxu0
    %v151 = vpop.f32.mrb[0].mxu0
    %152 = vdwg.mxu0
    %v153 = vadd.f32 %v47, %v148
    %154 = vst [vmem:[#allocation2] sm:$0xff] %v153
    // Predicated region
    $region26: #{tpu_custom_call.1} parent=1 // pred_check
      %p155 = pneg %p42
    $region27: #{tpu_custom_call.1} parent=1 // pred_check_branch
      %157 = sbr.rel (%p155) target = $region29
    $region28: #{tpu_custom_call.1} parent=1 // pred_region
      %v158 = vld [vmem:[#allocation2] sm:$0xff]
      %v159 = vld [vmem:[%s2] sm:$0x1]
      %v161 = vlaneseq
      %v162 = vshrl.u32 %v161, 7
      %v163 = vsub.s32 0, %v162
      %v164 = vrot.slane %v159, %v163
      %v166 = vadd.f32 %v158, %v164
      %v167 = vxor.u32 %v166, 2147483648
      %v168 = vmul.f32 %v167, 1.442695
      %v169 = vpow.pop %v168
      %v170 = vadd.f32 %v169, 1.0
      %v171 = vrcp.pop %v170
      %v172 = vmul.f32 1.0, %v171
      %v173 = vmul.f32 %v166, %v172
      %v174 = vpack.c.bf16 %v173, %v173
      %175 = vst [vmem:[#allocation8] sm:$0xf] %v174
    $region29: #{tpu_custom_call.1} parent=1 // pred_fallthru
      _
    // Predicated region
    $region30: #{tpu_custom_call.1} parent=1 // pred_check
      _
    $region31: #{tpu_custom_call.1} parent=1 // pred_check_branch
      %177 = sbr.rel (0) target = $region33
    $region32: #{tpu_custom_call.1} parent=1 // pred_region
      %s179 = ssub.s32 64, 64
      %180 = vsyncadd [#allocation5], %s179
      %s182 = sshll.u32 [#allocation8], 4
      %s183 = int_to_ptr.vmem [resolvable:$true] %s182
      %185 = dma.vmem_to_hbm [thread:$0]  %s183, 64, %s3, [#allocation5]
    $region33: #{tpu_custom_call.1} parent=1 // pred_fallthru
      _
    // Predicated region
    $region34: #{tpu_custom_call.1} parent=1 // pred_check
      _
    $region35: #{tpu_custom_call.1} parent=1 // pred_check_branch
      %187 = sbr.rel (0) target = $region37
    $region36: #{tpu_custom_call.1} parent=1 // pred_region
      %188 = dma.done [#allocation5], 64
    $region37: #{tpu_custom_call.1} parent=1 // pred_fallthru
      _
    %189 = vsyncpa [#allocation4], 1
    %190 = vsyncpa [#allocation7], 1
    %191 = vsyncpa [#allocation5], 1

</llo_original>
